<compile_context>
chip_gen: v5e
topology: v5e:2x2
jax: 0.10.0
libtpu: 0.0.40
codegen_flags: <defaults>
</compile_context>

<pallas_src>
import math
import functools

import jax
import jax.numpy as jnp
from jax.experimental import pallas as pl
from jax.experimental.pallas import tpu as pltpu


def _leaky_relu(x, slope=0.2):
    return jnp.where(x > 0, x, slope * x)


def _layer_norm(x, gamma, beta, eps=1e-5):
    mu = jnp.mean(x, axis=-1, keepdims=True)
    var = jnp.mean((x - mu) ** 2, axis=-1, keepdims=True)
    return (x - mu) * jax.lax.rsqrt(var + eps) * gamma + beta


def _pick_tile(n, prefs):
    for p in prefs:
        if n >= p and n % p == 0:
            return p
    return n


def _pick_row_tile(seq_len, max_rows):
    """Largest divisor of seq_len that is <= max_rows and is a multiple of 8 (or the full dim)."""
    for cand in range(min(seq_len, max_rows), 0, -1):
        if seq_len % cand == 0 and (cand % 8 == 0 or cand == seq_len):
            return cand
    return seq_len


def _cparams(dims, vmem_limit_bytes=None):
    if vmem_limit_bytes is None:
        return pltpu.CompilerParams(dimension_semantics=dims)
    return pltpu.CompilerParams(dimension_semantics=dims,
                                vmem_limit_bytes=vmem_limit_bytes)


def _cost(flops, transcendentals, bytes_accessed):
    return pl.CostEstimate(flops=int(flops), transcendentals=int(transcendentals),
                           bytes_accessed=int(bytes_accessed))


# ---------------------------------------------------------------------------
# Kernel 1: VectorQuantizer + fused projections, head-major bf16 writeback
# ---------------------------------------------------------------------------
def _vq_proj_kernel(x_ref, embt_ref, emb_ref, e2_ref, wqkv_ref,
                    q_ref, k_ref, v_ref, kn_ref, vn_ref, sse_ref,
                    *, compute_dtype):
    j = pl.program_id(1)
    H, _, hd = q_ref.shape
    D = x_ref.shape[-1]

    x = x_ref[...]                                    # [TR, D] f32
    xc = x.astype(compute_dtype)

    # Fused Q/K/V projection; Wq columns are pre-scaled by 1/(sqrt(hd)*temper).
    qkv = jnp.dot(xc, wqkv_ref[...], preferred_element_type=jnp.float32)   # [TR, 3D]

    # --- VectorQuantizer: softmax(-(x^2 - 2 x.e + e^2)) == softmax(2 x.e - e^2) ---
    # TODO(synk): codebook kept fully resident; very large codebooks need an NE-tiled
    #             online softmax.
    xe = jnp.dot(xc, embt_ref[...], preferred_element_type=jnp.float32)    # [TR, NE]
    logits = 2.0 * xe - e2_ref[...]
    logits = logits - jnp.max(logits, axis=-1, keepdims=True)
    w = jnp.exp(logits)
    w = w / jnp.sum(w, axis=-1, keepdims=True)        # exact divide (feeds codebook matmul)
    quant = jnp.dot(w.astype(compute_dtype), emb_ref[...],
                    preferred_element_type=jnp.float32)                    # [TR, D]

    # Per-batch SSE accumulator (one (1,1) block per batch); scalar loss finished outside.
    diff = quant - x
    @pl.when(j == 0)
    def _():
        sse_ref[...] = jnp.zeros_like(sse_ref)
    sse_ref[...] += jnp.sum(diff * diff, axis=(0, 1), keepdims=True)

    # Fused K/V projection of the quantized tokens, reusing the resident fused weight.
    # TODO(synk): straight-through / detach backward semantics are forward-only here.
    kvq = jnp.dot(quant.astype(compute_dtype), wqkv_ref[:, D:],
                  preferred_element_type=jnp.float32)                      # [TR, 2D]

    od = q_ref.dtype
    for h in range(H):                                # static unroll, head-major writeback
        a, b = h * hd, (h + 1) * hd
        q_ref[h] = qkv[:, a:b].astype(od)
        k_ref[h] = qkv[:, D + a:D + b].astype(od)
        v_ref[h] = qkv[:, 2 * D + a:2 * D + b].astype(od)
        kn_ref[h] = kvq[:, a:b].astype(od)
        vn_ref[h] = kvq[:, D + a:D + b].astype(od)


# ---------------------------------------------------------------------------
# Kernel 2: flash-style attention over (group, q-tile, kv-tile), dual K/V streams
# ---------------------------------------------------------------------------
def _attn_kernel(q_ref, k_ref, kn_ref, v_ref, vn_ref, o_ref,
                 m_sc, l_sc, acc_sc):
    ki = pl.program_id(2)

    @pl.when(ki == 0)
    def _():
        m_sc[...] = jnp.full_like(m_sc, -jnp.inf)
        l_sc[...] = jnp.zeros_like(l_sc)
        acc_sc[...] = jnp.zeros_like(acc_sc)

    # q already carries 1/(sqrt(hd)*temper) (folded into Wq).  All inputs are bf16.
    q = q_ref[...]                                                       # [TG, TQ, hd]
    s1 = jnp.einsum('gqd,gkd->gqk', q, k_ref[...],
                    preferred_element_type=jnp.float32)
    s2 = jnp.einsum('gqd,gkd->gqk', q, kn_ref[...],
                    preferred_element_type=jnp.float32)

    m_prev = m_sc[...]
    m_new = jnp.maximum(m_prev,
                        jnp.maximum(s1.max(-1, keepdims=True),
                                    s2.max(-1, keepdims=True)))
    alpha = jnp.exp(m_prev - m_new)
    p1 = jnp.exp(s1 - m_new)
    p2 = jnp.exp(s2 - m_new)
    l_sc[...] = (alpha * l_sc[...]
                 + p1.sum(-1, keepdims=True) + p2.sum(-1, keepdims=True))
    acc_sc[...] = (alpha * acc_sc[...]
                   + jnp.einsum('gqk,gkd->gqd', p1.astype(v_ref.dtype), v_ref[...],
                                preferred_element_type=jnp.float32)
                   + jnp.einsum('gqk,gkd->gqd', p2.astype(vn_ref.dtype), vn_ref[...],
                                preferred_element_type=jnp.float32))
    m_sc[...] = m_new

    @pl.when(ki == pl.num_programs(2) - 1)
    def _():
        o_ref[...] = (acc_sc[...] *
                      pl.reciprocal(l_sc[...], approx=True)).astype(o_ref.dtype)


# ---------------------------------------------------------------------------
# Kernel 3: linear_final (per-head accumulation) + LN1 + FFN + LN2
# ---------------------------------------------------------------------------
def _out_mlp_kernel(ctx_ref, h_ref, wf_ref, f1w_ref, f1b_ref, f2w_ref, f2b_ref,
                    ln1g_ref, ln1b_ref, ln2g_ref, ln2b_ref, out_ref,
                    *, compute_dtype):
    H, _, hd = ctx_ref.shape
    hres = h_ref[...]                                                    # [TR, D] f32

    # linear_final over the head-major context: h_sa = sum_h ctx[h] @ Wf[h*hd:(h+1)*hd, :]
    h_sa = jnp.dot(ctx_ref[0], wf_ref[0:hd, :], preferred_element_type=jnp.float32)
    for h in range(1, H):
        h_sa = h_sa + jnp.dot(ctx_ref[h], wf_ref[h * hd:(h + 1) * hd, :],
                              preferred_element_type=jnp.float32)
    h_sa = _leaky_relu(h_sa)
    h1 = _layer_norm(h_sa + hres, ln1g_ref[...], ln1b_ref[...])
    hf = jnp.dot(h1.astype(compute_dtype), f1w_ref[...],
                 preferred_element_type=jnp.float32) + f1b_ref[...]
    hf = _leaky_relu(hf)
    hf = jnp.dot(hf.astype(compute_dtype), f2w_ref[...],
                 preferred_element_type=jnp.float32) + f2b_ref[...]
    out_ref[...] = _layer_norm(h1 + hf, ln2g_ref[...], ln2b_ref[...])


# ---------------------------------------------------------------------------
# Wrapper
# ---------------------------------------------------------------------------
def gt_layer(h, params, *, nheads, temper=1.0, commitment_cost=0.25,
             compute_dtype=jnp.bfloat16, row_tile=512, vmem_limit_bytes=None):
    (wq, wk, wv, wf, emb, f1w, f1b, f2w, f2b,
     ln1g, ln1b, ln2g, ln2b) = params
    B, S, D = h.shape
    H = nheads
    hd = D // H
    NE = emb.shape[0]
    BS = B * S
    G = B * H

    # Weight prep (once): fold attention scale & 1/temperature into Wq, fuse QKV, pre-cast
    # the resident matmul operands to the compute dtype (half the resident VMEM / HBM DMA).
    scale = 1.0 / (math.sqrt(hd) * temper)
    wqkv = jnp.concatenate([wq * scale, wk, wv], axis=1).astype(compute_dtype)  # [D, 3D]
    embt = emb.T.astype(compute_dtype)                                          # [D, NE]
    emb_c = emb.astype(compute_dtype)                                           # [NE, D]
    e2 = jnp.sum(emb * emb, axis=1, keepdims=True).T                            # [1, NE] f32
    wf_c = wf.astype(compute_dtype)
    f1w_c = f1w.astype(compute_dtype)
    f2w_c = f2w.astype(compute_dtype)
    f1b2 = f1b.reshape(1, -1)
    f2b2 = f2b.reshape(1, -1)
    ln1g2, ln1b2 = ln1g.reshape(1, -1), ln1b.reshape(1, -1)
    ln2g2, ln2b2 = ln2g.reshape(1, -1), ln2b.reshape(1, -1)

    h32 = h.astype(jnp.float32)

    # Row tile (within one sequence) for stages 1 & 3, capped by a live-intermediate budget
    # (stage 1 keeps [tr, 3D] qkv and [tr, NE] logits live; avoids vreg/VMEM spills on v7x).
    bytes_per_row = 4 * (7 * D + 2 * NE)
    budget = 8 * 1024 * 1024
    max_rows = max(8, min(row_tile, budget // max(bytes_per_row, 1)))
    tr = _pick_row_tile(S, max_rows)
    n_sub = S // tr

    # --- Stage 1: VQ + fused projections, head-major bf16 outputs ---
    kernel1 = functools.partial(_vq_proj_kernel, compute_dtype=compute_dtype)
    const4 = lambda m: pl.BlockSpec(m.shape, lambda b, j: (0, 0))
    head_out = pl.BlockSpec((None, H, tr, hd), lambda b, j: (b, 0, j, 0))
    flops1 = 2 * BS * D * (5 * D + 2 * NE)
    bytes1 = (BS * D * 4 + 5 * BS * D * 2
              + 2 * (D * 3 * D + 2 * D * NE) + 4 * NE + 4 * B)
    q4, k4, v4, kn4, vn4, sse = pl.pallas_call(
        kernel1,
        grid=(B, n_sub),
        in_specs=[
            pl.BlockSpec((None, tr, D), lambda b, j: (b, j, 0)),  # h tile
            const4(embt),                                         # emb^T  (resident)
            const4(emb_c),                                        # emb    (resident)
            const4(e2),                                           # sum(emb^2) per code
            const4(wqkv),                                         # [Wq*s | Wk | Wv]
        ],
        out_specs=(head_out, head_out, head_out, head_out, head_out,
                   pl.BlockSpec((None, 1, 1), lambda b, j: (b, 0, 0))),
        out_shape=(
            jax.ShapeDtypeStruct((B, H, S, hd), compute_dtype),   # q
            jax.ShapeDtypeStruct((B, H, S, hd), compute_dtype),   # k
            jax.ShapeDtypeStruct((B, H, S, hd), compute_dtype),   # v
            jax.ShapeDtypeStruct((B, H, S, hd), compute_dtype),   # k_new
            jax.ShapeDtypeStruct((B, H, S, hd), compute_dtype),   # v_new
            jax.ShapeDtypeStruct((B, 1, 1), jnp.float32),         # per-batch SSE partials
        ),
        compiler_params=_cparams(("parallel", "arbitrary"), vmem_limit_bytes),
        cost_estimate=_cost(flops1, BS * NE, bytes1),
    )(h32, embt, emb_c, e2, wqkv)

    vq_loss = (1.0 + commitment_cost) * jnp.sum(sse) / (BS * D)

    # Free reshapes only (no XLA transposes): [B, H, S, hd] -> [G, S, hd].
    qh = q4.reshape(G, S, hd)
    kh = k4.reshape(G, S, hd)
    vh = v4.reshape(G, S, hd)
    knh = kn4.reshape(G, S, hd)
    vnh = vn4.reshape(G, S, hd)

    tg = _pick_tile(G, (8, 4, 2, 1))
    tq = _pick_row_tile(S, 256)
    tk = _pick_row_tile(S, 256)

    # --- Stage 2: flash-style attention (original + quantized K/V streams), bf16 I/O ---
    qspec = pl.BlockSpec((tg, tq, hd), lambda g, qi, ki: (g, qi, 0))
    kvspec = pl.BlockSpec((tg, tk, hd), lambda g, qi, ki: (g, ki, 0))
    flops2 = 8 * G * S * S * hd
    bytes2 = 12 * G * S * hd
    ctx = pl.pallas_call(
        _attn_kernel,
        grid=(G // tg, S // tq, S // tk),
        in_specs=[qspec, kvspec, kvspec, kvspec, kvspec],
        out_specs=pl.BlockSpec((tg, tq, hd), lambda g, qi, ki: (g, qi, 0)),
        out_shape=jax.ShapeDtypeStruct((G, S, hd), compute_dtype),
        scratch_shapes=[pltpu.VMEM((tg, tq, 1), jnp.float32),
                        pltpu.VMEM((tg, tq, 1), jnp.float32),
                        pltpu.VMEM((tg, tq, hd), jnp.float32)],
        compiler_params=_cparams(("parallel", "parallel", "arbitrary"),
                                 vmem_limit_bytes),
        cost_estimate=_cost(flops2, 2 * G * S * S + G * S, bytes2),
    )(qh, kh, knh, vh, vnh)

    ctx4 = ctx.reshape(B, H, S, hd)          # free reshape; consumed head-major by stage 3

    # --- Stage 3: linear_final + LN1 + FFN + LN2 ---
    kernel3 = functools.partial(_out_mlp_kernel, compute_dtype=compute_dtype)
    row_spec = pl.BlockSpec((None, tr, D), lambda b, j: (b, j, 0))
    wmat = lambda m: pl.BlockSpec(m.shape, lambda b, j: (0, 0))
    flops3 = 2 * BS * D * D * 3
    bytes3 = BS * D * (2 + 4 + 4) + 2 * 3 * D * D + 8 * D
    h2 = pl.pallas_call(
        kernel3,
        grid=(B, n_sub),
        in_specs=[pl.BlockSpec((None, H, tr, hd), lambda b, j: (b, 0, j, 0)),  # ctx
                  row_spec,                                                    # residual h
                  wmat(wf_c), wmat(f1w_c), wmat(f1b2), wmat(f2w_c), wmat(f2b2),
                  wmat(ln1g2), wmat(ln1b2), wmat(ln2g2), wmat(ln2b2)],
        out_specs=row_spec,
        out_shape=jax.ShapeDtypeStruct((B, S, D), jnp.float32),
        compiler_params=_cparams(("parallel", "parallel"), vmem_limit_bytes),
        cost_estimate=_cost(flops3, 0, bytes3),
    )(ctx4, h32, wf_c, f1w_c, f1b2, f2w_c, f2b2, ln1g2, ln1b2, ln2g2, ln2b2)

    # TODO(synk): optional attention mask of the PyTorch forward is not implemented
    #             (mask=None path only); dropout layers are identity (eval mode).
    return h2, vq_loss


# ---------------------------------------------------------------------------
# Pure-JAX reference mirroring the PyTorch forward (eval mode, vq_flag=True) with the
# same bf16-input / f32-accumulate matmul policy as the kernels.
# ---------------------------------------------------------------------------
def gt_layer_ref(h, params, *, nheads, temper=1.0, commitment_cost=0.25,
                 compute_dtype=jnp.bfloat16):
    (wq, wk, wv, wf, emb, f1w, f1b, f2w, f2b,
     ln1g, ln1b, ln2g, ln2b) = params
    B, S, D = h.shape
    hd = D // nheads

    def mm(a, b):
        return jnp.dot(a.astype(compute_dtype), b.astype(compute_dtype),
                       preferred_element_type=jnp.float32)

    fh = h.reshape(-1, D).astype(jnp.float32)
    q, k, v = mm(fh, wq), mm(fh, wk), mm(fh, wv)
    dist = (jnp.sum(fh ** 2, 1, keepdims=True) - 2.0 * mm(fh, emb.T)
            + jnp.sum(emb ** 2, 1, keepdims=True).T)
    wts = jax.nn.softmax(-dist, axis=1)
    quant = mm(wts, emb)
    mse = jnp.mean((quant - fh) ** 2)
    vq_loss = (1.0 + commitment_cost) * mse
    k_new, v_new = mm(quant, wk), mm(quant, wv)

    def heads(x):
        return x.reshape(B, S, nheads, hd).transpose(0, 2, 1, 3)

    q_ = heads(q)
    k_ = jnp.concatenate([heads(k), heads(k_new)], axis=2)
    v_ = jnp.concatenate([heads(v), heads(v_new)], axis=2)
    score = jnp.einsum('bnqd,bnkd->bnqk', q_.astype(compute_dtype),
                       k_.astype(compute_dtype),
                       preferred_element_type=jnp.float32) / math.sqrt(hd)
    p = jax.nn.softmax(score / temper, axis=-1)
    ctx = jnp.einsum('bnqk,bnkd->bnqd', p.astype(compute_dtype),
                     v_.astype(compute_dtype),
                     preferred_element_type=jnp.float32)
    h_sa = ctx.transpose(0, 2, 1, 3).reshape(B * S, D)
    h_sa = _leaky_relu(mm(h_sa, wf))
    h1 = _layer_norm(h_sa + fh, ln1g.reshape(1, -1), ln1b.reshape(1, -1))
    hf = _leaky_relu(mm(h1, f1w) + f1b.reshape(1, -1))
    hf = mm(hf, f2w) + f2b.reshape(1, -1)
    h2 = _layer_norm(h1 + hf, ln2g.reshape(1, -1), ln2b.reshape(1, -1))
    return h2.reshape(B, S, D), vq_loss


if __name__ == "__main__":
    B, S, D = 2, 8, 32
    NHEADS = 2
    NUM_EMB = 128

    key = jax.random.PRNGKey(0)
    ks = jax.random.split(key, 10)

    def lin_w(k, fan_in, fan_out):
        bound = 1.0 / math.sqrt(fan_in)
        return jax.random.uniform(k, (fan_in, fan_out), jnp.float32, -bound, bound)

    wq = lin_w(ks[0], D, D)
    wk = lin_w(ks[1], D, D)
    wv = lin_w(ks[2], D, D)
    wf = lin_w(ks[3], D, D)
    emb = jax.random.uniform(ks[4], (NUM_EMB, D), jnp.float32,
                             -1.0 / NUM_EMB, 1.0 / NUM_EMB)
    f1w = lin_w(ks[5], D, D)
    f1b = jax.random.uniform(ks[6], (1, D), jnp.float32, -0.1, 0.1)
    f2w = lin_w(ks[7], D, D)
    f2b = jax.random.uniform(ks[8], (1, D), jnp.float32, -0.1, 0.1)
    ln1g = jnp.ones((1, D), jnp.float32); ln1b = jnp.zeros((1, D), jnp.float32)
    ln2g = jnp.ones((1, D), jnp.float32); ln2b = jnp.zeros((1, D), jnp.float32)

    params = (wq, wk, wv, wf, emb, f1w, f1b, f2w, f2b,
              ln1g, ln1b, ln2g, ln2b)

    h = jax.random.normal(ks[9], (B, S, D), jnp.float32)

    h2, vq_loss = gt_layer(h, params, nheads=NHEADS, temper=1.0,
                           commitment_cost=0.25)
    jax.block_until_ready((h2, vq_loss))

    h2_ref, vq_loss_ref = gt_layer_ref(h, params, nheads=NHEADS, temper=1.0,
                                       commitment_cost=0.25)
    assert jnp.allclose(h2, h2_ref, atol=2e-2, rtol=2e-2), "h2 mismatch"
    assert jnp.allclose(vq_loss, vq_loss_ref, atol=1e-3, rtol=1e-2), "vq_loss mismatch"

    print("KERNEL_OK")
</pallas_src>

<mosaic_0001>
module attributes {stable_mosaic.version = 11 : i64} {
  func.func @_vq_proj_kernel(%arg0: i32, %arg1: i32, %arg2: memref<1x8x32xf32, #tpu.memory_space<vmem>>, %arg3: memref<32x128xbf16, #tpu.memory_space<vmem>>, %arg4: memref<128x32xbf16, #tpu.memory_space<vmem>>, %arg5: memref<1x128xf32, #tpu.memory_space<vmem>>, %arg6: memref<32x96xbf16, #tpu.memory_space<vmem>>, %arg7: memref<1x2x8x16xbf16, #tpu.memory_space<vmem>>, %arg8: memref<1x2x8x16xbf16, #tpu.memory_space<vmem>>, %arg9: memref<1x2x8x16xbf16, #tpu.memory_space<vmem>>, %arg10: memref<1x2x8x16xbf16, #tpu.memory_space<vmem>>, %arg11: memref<1x2x8x16xbf16, #tpu.memory_space<vmem>>, %arg12: memref<1x1x1xf32, #tpu.memory_space<vmem>>) attributes {dimension_semantics = [#tpu.dimension_semantics<parallel>, #tpu.dimension_semantics<arbitrary>], iteration_bounds = array<i64: 2, 1>, scalar_prefetch = 0 : i64, scratch_operands = 0 : i64, tpu.core_type = #tpu.core_type<tc>, window_params = [{transform_indices = @transform_0, window_bounds = array<i64: 1, 8, 32>}, {pipeline_mode = #tpu.pipeline_mode<synchronous>, transform_indices = @transform_1, window_bounds = array<i64: 32, 128>}, {pipeline_mode = #tpu.pipeline_mode<synchronous>, transform_indices = @transform_2, window_bounds = array<i64: 128, 32>}, {pipeline_mode = #tpu.pipeline_mode<synchronous>, transform_indices = @transform_3, window_bounds = array<i64: 1, 128>}, {pipeline_mode = #tpu.pipeline_mode<synchronous>, transform_indices = @transform_4, window_bounds = array<i64: 32, 96>}, {transform_indices = @transform_5, window_bounds = array<i64: 1, 2, 8, 16>}, {transform_indices = @transform_6, window_bounds = array<i64: 1, 2, 8, 16>}, {transform_indices = @transform_7, window_bounds = array<i64: 1, 2, 8, 16>}, {transform_indices = @transform_8, window_bounds = array<i64: 1, 2, 8, 16>}, {transform_indices = @transform_9, window_bounds = array<i64: 1, 2, 8, 16>}, {transform_indices = @transform_10, window_bounds = array<i64: 1, 1, 1>}]} {
    %c0 = arith.constant 0 : index
    %c0_0 = arith.constant 0 : index
    %c0_1 = arith.constant 0 : index
    %0 = vector.load %arg2[%c0, %c0_0, %c0_1] : memref<1x8x32xf32, #tpu.memory_space<vmem>>, vector<1x8x32xf32>
    %1 = vector.shape_cast %0 : vector<1x8x32xf32> to vector<8x32xf32>
    %2 = arith.truncf %1 : vector<8x32xf32> to vector<8x32xbf16>
    %c0_2 = arith.constant 0 : index
    %c0_3 = arith.constant 0 : index
    %3 = vector.load %arg6[%c0_2, %c0_3] : memref<32x96xbf16, #tpu.memory_space<vmem>>, vector<32x96xbf16>
    %cst = arith.constant dense<0.000000e+00> : vector<8x96xf32>
    %4 = tpu.matmul %2, %3, %cst {dimension_numbers = #tpu.dot_dimension_numbers<[1], [0], [0], [1], [0, 0, 1, 1], [], []>} : vector<8x32xbf16>, vector<32x96xbf16>, vector<8x96xf32> -> vector<8x96xf32>
    %c0_4 = arith.constant 0 : index
    %c0_5 = arith.constant 0 : index
    %5 = vector.load %arg3[%c0_4, %c0_5] : memref<32x128xbf16, #tpu.memory_space<vmem>>, vector<32x128xbf16>
    %cst_6 = arith.constant dense<0.000000e+00> : vector<8x128xf32>
    %6 = tpu.matmul %2, %5, %cst_6 {dimension_numbers = #tpu.dot_dimension_numbers<[1], [0], [0], [1], [0, 0, 1, 1], [], []>} : vector<8x32xbf16>, vector<32x128xbf16>, vector<8x128xf32> -> vector<8x128xf32>
    %cst_7 = arith.constant 2.000000e+00 : f32
    %7 = vector.broadcast %cst_7 : f32 to vector<8x128xf32>
    %8 = arith.mulf %7, %6 : vector<8x128xf32>
    %c0_8 = arith.constant 0 : index
    %c0_9 = arith.constant 0 : index
    %9 = vector.load %arg5[%c0_8, %c0_9] : memref<1x128xf32, #tpu.memory_space<vmem>>, vector<1x128xf32>
    %10 = vector.broadcast %9 : vector<1x128xf32> to vector<8x128xf32>
    %11 = arith.subf %8, %10 : vector<8x128xf32>
    %cst_10 = arith.constant dense<0xFF800000> : vector<8xf32>
    %12 = vector.multi_reduction <maximumf>, %11, %cst_10 [1] : vector<8x128xf32> to vector<8xf32>
    %13 = vector.shape_cast %12 : vector<8xf32> to vector<8x1xf32>
    %14 = vector.broadcast %13 : vector<8x1xf32> to vector<8x128xf32>
    %15 = arith.subf %11, %14 : vector<8x128xf32>
    %16 = math.exp %15 : vector<8x128xf32>
    %cst_11 = arith.constant dense<0.000000e+00> : vector<8xf32>
    %17 = vector.multi_reduction <add>, %16, %cst_11 [1] : vector<8x128xf32> to vector<8xf32>
    %18 = vector.shape_cast %17 : vector<8xf32> to vector<8x1xf32>
    %19 = vector.broadcast %18 : vector<8x1xf32> to vector<8x128xf32>
    %20 = arith.divf %16, %19 : vector<8x128xf32>
    %21 = arith.truncf %20 : vector<8x128xf32> to vector<8x128xbf16>
    %c0_12 = arith.constant 0 : index
    %c0_13 = arith.constant 0 : index
    %22 = vector.load %arg4[%c0_12, %c0_13] : memref<128x32xbf16, #tpu.memory_space<vmem>>, vector<128x32xbf16>
    %cst_14 = arith.constant dense<0.000000e+00> : vector<8x32xf32>
    %23 = tpu.matmul %21, %22, %cst_14 {dimension_numbers = #tpu.dot_dimension_numbers<[1], [0], [0], [1], [0, 0, 1, 1], [], []>} : vector<8x128xbf16>, vector<128x32xbf16>, vector<8x32xf32> -> vector<8x32xf32>
    %24 = arith.subf %23, %1 : vector<8x32xf32>
    %c0_i32 = arith.constant 0 : i32
    %25 = arith.cmpi eq, %arg1, %c0_i32 : i32
    %26 = arith.extui %25 : i1 to i32
    %c0_i32_15 = arith.constant 0 : i32
    %27 = arith.cmpi ne, %26, %c0_i32_15 : i32
    scf.if %27 {
      %cst_64 = arith.constant 0.000000e+00 : f32
      %93 = vector.broadcast %cst_64 : f32 to vector<1x1xf32>
      %c0_65 = arith.constant 0 : index
      %c0_66 = arith.constant 0 : index
      %c0_67 = arith.constant 0 : index
      %94 = vector.load %arg12[%c0_65, %c0_66, %c0_67] : memref<1x1x1xf32, #tpu.memory_space<vmem>>, vector<1x1x1xf32>
      %95 = vector.shape_cast %94 : vector<1x1x1xf32> to vector<1x1xf32>
      %96 = vector.shape_cast %93 : vector<1x1xf32> to vector<1x1x1xf32>
      tpu.vector_store %arg12[%c0_65, %c0_66, %c0_67], %96 {strides = array<i32>} : memref<1x1x1xf32, #tpu.memory_space<vmem>>, vector<1x1x1xf32>,
    } else {
    }
    %c0_16 = arith.constant 0 : index
    %c0_17 = arith.constant 0 : index
    %c0_18 = arith.constant 0 : index
    %28 = vector.load %arg12[%c0_16, %c0_17, %c0_18] : memref<1x1x1xf32, #tpu.memory_space<vmem>>, vector<1x1x1xf32>
    %29 = vector.shape_cast %28 : vector<1x1x1xf32> to vector<1x1xf32>
    %30 = arith.mulf %24, %24 : vector<8x32xf32>
    %31 = vector.shape_cast %30 : vector<8x32xf32> to vector<1x8x32xf32>
    %cst_19 = arith.constant dense<0.000000e+00> : vector<1xf32>
    %32 = vector.multi_reduction <add>, %31, %cst_19 [1, 2] : vector<1x8x32xf32> to vector<1xf32>
    %33 = vector.shape_cast %32 : vector<1xf32> to vector<1x1x1xf32>
    %34 = vector.extract %33[0, 0, 0] : f32 from vector<1x1x1xf32>
    %35 = vector.broadcast %34 : f32 to vector<1x1xf32>
    %36 = arith.addf %29, %35 : vector<1x1xf32>
    %c0_20 = arith.constant 0 : index
    %c0_21 = arith.constant 0 : index
    %c0_22 = arith.constant 0 : index
    %37 = vector.load %arg12[%c0_20, %c0_21, %c0_22] : memref<1x1x1xf32, #tpu.memory_space<vmem>>, vector<1x1x1xf32>
    %38 = vector.shape_cast %37 : vector<1x1x1xf32> to vector<1x1xf32>
    %39 = vector.shape_cast %36 : vector<1x1xf32> to vector<1x1x1xf32>
    tpu.vector_store %arg12[%c0_20, %c0_21, %c0_22], %39 {strides = array<i32>} : memref<1x1x1xf32, #tpu.memory_space<vmem>>, vector<1x1x1xf32>,
    %40 = arith.truncf %23 : vector<8x32xf32> to vector<8x32xbf16>
    %c0_23 = arith.constant 0 : index
    %c32 = arith.constant 32 : index
    %41 = vector.load %arg6[%c0_23, %c32] : memref<32x96xbf16, #tpu.memory_space<vmem>>, vector<32x64xbf16>
    %cst_24 = arith.constant dense<0.000000e+00> : vector<8x64xf32>
    %42 = tpu.matmul %40, %41, %cst_24 {dimension_numbers = #tpu.dot_dimension_numbers<[1], [0], [0], [1], [0, 0, 1, 1], [], []>} : vector<8x32xbf16>, vector<32x64xbf16>, vector<8x64xf32> -> vector<8x64xf32>
    %43 = vector.extract_strided_slice %4 {offsets = [0, 0], sizes = [8, 16], strides = [1, 1]} : vector<8x96xf32> to vector<8x16xf32>
    %44 = arith.truncf %43 : vector<8x16xf32> to vector<8x16xbf16>
    %c0_25 = arith.constant 0 : index
    %c0_26 = arith.constant 0 : index
    %c0_27 = arith.constant 0 : index
    %c0_28 = arith.constant 0 : index
    %45 = vector.load %arg7[%c0_25, %c0_26, %c0_27, %c0_28] : memref<1x2x8x16xbf16, #tpu.memory_space<vmem>>, vector<1x1x8x16xbf16>
    %46 = vector.shape_cast %45 : vector<1x1x8x16xbf16> to vector<8x16xbf16>
    %47 = vector.shape_cast %44 : vector<8x16xbf16> to vector<1x1x8x16xbf16>
    tpu.vector_store %arg7[%c0_25, %c0_26, %c0_27, %c0_28], %47 {strides = array<i32>} : memref<1x2x8x16xbf16, #tpu.memory_space<vmem>>, vector<1x1x8x16xbf16>,
    %48 = vector.extract_strided_slice %4 {offsets = [0, 32], sizes = [8, 16], strides = [1, 1]} : vector<8x96xf32> to vector<8x16xf32>
    %49 = arith.truncf %48 : vector<8x16xf32> to vector<8x16xbf16>
    %c0_29 = arith.constant 0 : index
    %c0_30 = arith.constant 0 : index
    %c0_31 = arith.constant 0 : index
    %c0_32 = arith.constant 0 : index
    %50 = vector.load %arg8[%c0_29, %c0_30, %c0_31, %c0_32] : memref<1x2x8x16xbf16, #tpu.memory_space<vmem>>, vector<1x1x8x16xbf16>
    %51 = vector.shape_cast %50 : vector<1x1x8x16xbf16> to vector<8x16xbf16>
    %52 = vector.shape_cast %49 : vector<8x16xbf16> to vector<1x1x8x16xbf16>
    tpu.vector_store %arg8[%c0_29, %c0_30, %c0_31, %c0_32], %52 {strides = array<i32>} : memref<1x2x8x16xbf16, #tpu.memory_space<vmem>>, vector<1x1x8x16xbf16>,
    %53 = vector.extract_strided_slice %4 {offsets = [0, 64], sizes = [8, 16], strides = [1, 1]} : vector<8x96xf32> to vector<8x16xf32>
    %54 = arith.truncf %53 : vector<8x16xf32> to vector<8x16xbf16>
    %c0_33 = arith.constant 0 : index
    %c0_34 = arith.constant 0 : index
    %c0_35 = arith.constant 0 : index
    %c0_36 = arith.constant 0 : index
    %55 = vector.load %arg9[%c0_33, %c0_34, %c0_35, %c0_36] : memref<1x2x8x16xbf16, #tpu.memory_space<vmem>>, vector<1x1x8x16xbf16>
    %56 = vector.shape_cast %55 : vector<1x1x8x16xbf16> to vector<8x16xbf16>
    %57 = vector.shape_cast %54 : vector<8x16xbf16> to vector<1x1x8x16xbf16>
    tpu.vector_store %arg9[%c0_33, %c0_34, %c0_35, %c0_36], %57 {strides = array<i32>} : memref<1x2x8x16xbf16, #tpu.memory_space<vmem>>, vector<1x1x8x16xbf16>,
    %58 = vector.extract_strided_slice %42 {offsets = [0, 0], sizes = [8, 16], strides = [1, 1]} : vector<8x64xf32> to vector<8x16xf32>
    %59 = arith.truncf %58 : vector<8x16xf32> to vector<8x16xbf16>
    %c0_37 = arith.constant 0 : index
    %c0_38 = arith.constant 0 : index
    %c0_39 = arith.constant 0 : index
    %c0_40 = arith.constant 0 : index
    %60 = vector.load %arg10[%c0_37, %c0_38, %c0_39, %c0_40] : memref<1x2x8x16xbf16, #tpu.memory_space<vmem>>, vector<1x1x8x16xbf16>
    %61 = vector.shape_cast %60 : vector<1x1x8x16xbf16> to vector<8x16xbf16>
    %62 = vector.shape_cast %59 : vector<8x16xbf16> to vector<1x1x8x16xbf16>
    tpu.vector_store %arg10[%c0_37, %c0_38, %c0_39, %c0_40], %62 {strides = array<i32>} : memref<1x2x8x16xbf16, #tpu.memory_space<vmem>>, vector<1x1x8x16xbf16>,
    %63 = vector.extract_strided_slice %42 {offsets = [0, 32], sizes = [8, 16], strides = [1, 1]} : vector<8x64xf32> to vector<8x16xf32>
    %64 = arith.truncf %63 : vector<8x16xf32> to vector<8x16xbf16>
    %c0_41 = arith.constant 0 : index
    %c0_42 = arith.constant 0 : index
    %c0_43 = arith.constant 0 : index
    %c0_44 = arith.constant 0 : index
    %65 = vector.load %arg11[%c0_41, %c0_42, %c0_43, %c0_44] : memref<1x2x8x16xbf16, #tpu.memory_space<vmem>>, vector<1x1x8x16xbf16>
    %66 = vector.shape_cast %65 : vector<1x1x8x16xbf16> to vector<8x16xbf16>
    %67 = vector.shape_cast %64 : vector<8x16xbf16> to vector<1x1x8x16xbf16>
    tpu.vector_store %arg11[%c0_41, %c0_42, %c0_43, %c0_44], %67 {strides = array<i32>} : memref<1x2x8x16xbf16, #tpu.memory_space<vmem>>, vector<1x1x8x16xbf16>,
    %68 = vector.extract_strided_slice %4 {offsets = [0, 16], sizes = [8, 16], strides = [1, 1]} : vector<8x96xf32> to vector<8x16xf32>
    %69 = arith.truncf %68 : vector<8x16xf32> to vector<8x16xbf16>
    %c0_45 = arith.constant 0 : index
    %c1 = arith.constant 1 : index
    %c0_46 = arith.constant 0 : index
    %c0_47 = arith.constant 0 : index
    %70 = vector.load %arg7[%c0_45, %c1, %c0_46, %c0_47] : memref<1x2x8x16xbf16, #tpu.memory_space<vmem>>, vector<1x1x8x16xbf16>
    %71 = vector.shape_cast %70 : vector<1x1x8x16xbf16> to vector<8x16xbf16>
    %72 = vector.shape_cast %69 : vector<8x16xbf16> to vector<1x1x8x16xbf16>
    tpu.vector_store %arg7[%c0_45, %c1, %c0_46, %c0_47], %72 {strides = array<i32>} : memref<1x2x8x16xbf16, #tpu.memory_space<vmem>>, vector<1x1x8x16xbf16>,
    %73 = vector.extract_strided_slice %4 {offsets = [0, 48], sizes = [8, 16], strides = [1, 1]} : vector<8x96xf32> to vector<8x16xf32>
    %74 = arith.truncf %73 : vector<8x16xf32> to vector<8x16xbf16>
    %c0_48 = arith.constant 0 : index
    %c1_49 = arith.constant 1 : index
    %c0_50 = arith.constant 0 : index
    %c0_51 = arith.constant 0 : index
    %75 = vector.load %arg8[%c0_48, %c1_49, %c0_50, %c0_51] : memref<1x2x8x16xbf16, #tpu.memory_space<vmem>>, vector<1x1x8x16xbf16>
    %76 = vector.shape_cast %75 : vector<1x1x8x16xbf16> to vector<8x16xbf16>
    %77 = vector.shape_cast %74 : vector<8x16xbf16> to vector<1x1x8x16xbf16>
    tpu.vector_store %arg8[%c0_48, %c1_49, %c0_50, %c0_51], %77 {strides = array<i32>} : memref<1x2x8x16xbf16, #tpu.memory_space<vmem>>, vector<1x1x8x16xbf16>,
    %78 = vector.extract_strided_slice %4 {offsets = [0, 80], sizes = [8, 16], strides = [1, 1]} : vector<8x96xf32> to vector<8x16xf32>
    %79 = arith.truncf %78 : vector<8x16xf32> to vector<8x16xbf16>
    %c0_52 = arith.constant 0 : index
    %c1_53 = arith.constant 1 : index
    %c0_54 = arith.constant 0 : index
    %c0_55 = arith.constant 0 : index
    %80 = vector.load %arg9[%c0_52, %c1_53, %c0_54, %c0_55] : memref<1x2x8x16xbf16, #tpu.memory_space<vmem>>, vector<1x1x8x16xbf16>
    %81 = vector.shape_cast %80 : vector<1x1x8x16xbf16> to vector<8x16xbf16>
    %82 = vector.shape_cast %79 : vector<8x16xbf16> to vector<1x1x8x16xbf16>
    tpu.vector_store %arg9[%c0_52, %c1_53, %c0_54, %c0_55], %82 {strides = array<i32>} : memref<1x2x8x16xbf16, #tpu.memory_space<vmem>>, vector<1x1x8x16xbf16>,
    %83 = vector.extract_strided_slice %42 {offsets = [0, 16], sizes = [8, 16], strides = [1, 1]} : vector<8x64xf32> to vector<8x16xf32>
    %84 = arith.truncf %83 : vector<8x16xf32> to vector<8x16xbf16>
    %c0_56 = arith.constant 0 : index
    %c1_57 = arith.constant 1 : index
    %c0_58 = arith.constant 0 : index
    %c0_59 = arith.constant 0 : index
    %85 = vector.load %arg10[%c0_56, %c1_57, %c0_58, %c0_59] : memref<1x2x8x16xbf16, #tpu.memory_space<vmem>>, vector<1x1x8x16xbf16>
    %86 = vector.shape_cast %85 : vector<1x1x8x16xbf16> to vector<8x16xbf16>
    %87 = vector.shape_cast %84 : vector<8x16xbf16> to vector<1x1x8x16xbf16>
    tpu.vector_store %arg10[%c0_56, %c1_57, %c0_58, %c0_59], %87 {strides = array<i32>} : memref<1x2x8x16xbf16, #tpu.memory_space<vmem>>, vector<1x1x8x16xbf16>,
    %88 = vector.extract_strided_slice %42 {offsets = [0, 48], sizes = [8, 16], strides = [1, 1]} : vector<8x64xf32> to vector<8x16xf32>
    %89 = arith.truncf %88 : vector<8x16xf32> to vector<8x16xbf16>
    %c0_60 = arith.constant 0 : index
    %c1_61 = arith.constant 1 : index
    %c0_62 = arith.constant 0 : index
    %c0_63 = arith.constant 0 : index
    %90 = vector.load %arg11[%c0_60, %c1_61, %c0_62, %c0_63] : memref<1x2x8x16xbf16, #tpu.memory_space<vmem>>, vector<1x1x8x16xbf16>
    %91 = vector.shape_cast %90 : vector<1x1x8x16xbf16> to vector<8x16xbf16>
    %92 = vector.shape_cast %89 : vector<8x16xbf16> to vector<1x1x8x16xbf16>
    tpu.vector_store %arg11[%c0_60, %c1_61, %c0_62, %c0_63], %92 {strides = array<i32>} : memref<1x2x8x16xbf16, #tpu.memory_space<vmem>>, vector<1x1x8x16xbf16>,
    return
  }
  func.func @transform_0(%arg0: i32, %arg1: i32) -> (i32, i32, i32) {
    %c0_i32 = arith.constant 0 : i32
    %c0_i32_0 = arith.constant 0 : i32
    return %arg0, %arg1, %c0_i32 : i32, i32, i32
  }
  func.func @transform_1(%arg0: i32, %arg1: i32) -> (i32, i32) {
    %c0_i32 = arith.constant 0 : i32
    %c0_i32_0 = arith.constant 0 : i32
    %c0_i32_1 = arith.constant 0 : i32
    return %c0_i32, %c0_i32_0 : i32, i32
  }
  func.func @transform_2(%arg0: i32, %arg1: i32) -> (i32, i32) {
    %c0_i32 = arith.constant 0 : i32
    %c0_i32_0 = arith.constant 0 : i32
    %c0_i32_1 = arith.constant 0 : i32
    return %c0_i32, %c0_i32_0 : i32, i32
  }
  func.func @transform_3(%arg0: i32, %arg1: i32) -> (i32, i32) {
    %c0_i32 = arith.constant 0 : i32
    %c0_i32_0 = arith.constant 0 : i32
    %c0_i32_1 = arith.constant 0 : i32
    return %c0_i32, %c0_i32_0 : i32, i32
  }
  func.func @transform_4(%arg0: i32, %arg1: i32) -> (i32, i32) {
    %c0_i32 = arith.constant 0 : i32
    %c0_i32_0 = arith.constant 0 : i32
    %c0_i32_1 = arith.constant 0 : i32
    return %c0_i32, %c0_i32_0 : i32, i32
  }
  func.func @transform_5(%arg0: i32, %arg1: i32) -> (i32, i32, i32, i32) {
    %c0_i32 = arith.constant 0 : i32
    %c0_i32_0 = arith.constant 0 : i32
    %c0_i32_1 = arith.constant 0 : i32
    return %arg0, %c0_i32, %arg1, %c0_i32_0 : i32, i32, i32, i32
  }
  func.func @transform_6(%arg0: i32, %arg1: i32) -> (i32, i32, i32, i32) {
    %c0_i32 = arith.constant 0 : i32
    %c0_i32_0 = arith.constant 0 : i32
    %c0_i32_1 = arith.constant 0 : i32
    return %arg0, %c0_i32, %arg1, %c0_i32_0 : i32, i32, i32, i32
  }
  func.func @transform_7(%arg0: i32, %arg1: i32) -> (i32, i32, i32, i32) {
    %c0_i32 = arith.constant 0 : i32
    %c0_i32_0 = arith.constant 0 : i32
    %c0_i32_1 = arith.constant 0 : i32
    return %arg0, %c0_i32, %arg1, %c0_i32_0 : i32, i32, i32, i32
  }
  func.func @transform_8(%arg0: i32, %arg1: i32) -> (i32, i32, i32, i32) {
    %c0_i32 = arith.constant 0 : i32
    %c0_i32_0 = arith.constant 0 : i32
    %c0_i32_1 = arith.constant 0 : i32
    return %arg0, %c0_i32, %arg1, %c0_i32_0 : i32, i32, i32, i32
  }
  func.func @transform_9(%arg0: i32, %arg1: i32) -> (i32, i32, i32, i32) {
    %c0_i32 = arith.constant 0 : i32
    %c0_i32_0 = arith.constant 0 : i32
    %c0_i32_1 = arith.constant 0 : i32
    return %arg0, %c0_i32, %arg1, %c0_i32_0 : i32, i32, i32, i32
  }
  func.func @transform_10(%arg0: i32, %arg1: i32) -> (i32, i32, i32) {
    %c0_i32 = arith.constant 0 : i32
    %c0_i32_0 = arith.constant 0 : i32
    %c0_i32_1 = arith.constant 0 : i32
    return %arg0, %c0_i32, %c0_i32_0 : i32, i32, i32
  }
}

</mosaic_0001>

<llo_original>
// kernel: tpu_custom_call.1
$region0: #{tpu_custom_call.1}
  #allocation0 [shape = 'u32[]', space=smem, size = 0x4, offset = 0x4, fixed_abs, tag = 'smem constant byte address 0x4 - core index']
  #allocation1 [shape = 'u32[72,128]{1,0:T(1,128)}', space=vmem, size = 0x9000, scoped, tag = 'internal scratch']
  %s0 = inlined_call_operand.vmem [shape: f32[2,8,32], index: 0, kind: input, shape index: {}]
  %s1 = inlined_call_operand.vmem [shape: bf16[32,128], index: 1, kind: input, shape index: {}]
  %s2 = inlined_call_operand.vmem [shape: bf16[128,32], index: 2, kind: input, shape index: {}]
  %s3 = inlined_call_operand.vmem [shape: f32[1,128], index: 3, kind: input, shape index: {}]
  %s4 = inlined_call_operand.vmem [shape: bf16[32,96], index: 4, kind: input, shape index: {}]
  %s5 = inlined_call_operand.hbm [shape: bf16[2,2,8,16], index: 5, kind: output, shape index: {0}]
  %s6 = inlined_call_operand.hbm [shape: bf16[2,2,8,16], index: 6, kind: output, shape index: {1}]
  %s7 = inlined_call_operand.hbm [shape: bf16[2,2,8,16], index: 7, kind: output, shape index: {2}]
  %s8 = inlined_call_operand.hbm [shape: bf16[2,2,8,16], index: 8, kind: output, shape index: {3}]
  %s9 = inlined_call_operand.hbm [shape: bf16[2,2,8,16], index: 9, kind: output, shape index: {4}]
  %s10 = inlined_call_operand.vmem [shape: f32[2,1,1], index: 10, kind: output, shape index: {5}]
  %11 = xla_tuple %s5, %s6, %s7, %s8, %s9, %s10
  %s12 = sld [smem:[#allocation0]]
  $region97: #{tpu_custom_call.1} parent=0
    _
  %s14 = ssub.s32 1, %s12
  %s15 = scalar_select 0, %s14, %s12
  $region1: #{tpu_custom_call.1} parent=0
    #allocation2 [shape = 'u8[8192]{0}', space=vmem, size = 0x2000, scoped, tag = 'output window, operand 0']
    #allocation3 [shape = 's32[2]{0}', space=sflag, size = 0x8, scoped, tag = 'scoped memory for tpu_custom_call.1']
    #allocation4 [shape = 'u8[8192]{0}', space=vmem, size = 0x2000, scoped, tag = 'output window, operand 1']
    #allocation5 [shape = 's32[2]{0}', space=sflag, size = 0x8, scoped, tag = 'scoped memory for tpu_custom_call.1']
    #allocation6 [shape = 'u8[8192]{0}', space=vmem, size = 0x2000, scoped, tag = 'output window, operand 2']
    #allocation7 [shape = 'u8[8192]{0}', space=vmem, size = 0x2000, scoped, tag = 'output window, operand 3']
    #allocation8 [shape = 's32[2]{0}', space=sflag, size = 0x8, scoped, tag = 'scoped memory for tpu_custom_call.1']
    #allocation9 [shape = 'u8[8192]{0}', space=vmem, size = 0x2000, scoped, tag = 'output window, operand 4']
    %16 = vsyncpa [#allocation3], 0
    %s17 = scalar_lea.sflag [#allocation3], 1
    %18 = vsyncpa %s17, 0
    %19 = vsyncpa [#allocation5], 0
    %s20 = scalar_lea.sflag [#allocation5], 1
    %21 = vsyncpa %s20, 0
    %22 = vsyncpa [#allocation8], 0
    %s23 = scalar_lea.sflag [#allocation8], 1
    %24 = vsyncpa %s23, 0
    loop: start=0, step=1, limit=4
    $region2: #{tpu_custom_call.1} parent=1 // loop_pre_header
      _
    $region3: #{tpu_custom_call.1} parent=1 // loop_header
      %s26 = sphi 0, %s30
      %p27 = scmp.ge.s32.totalorder %s26, 4
      %s33 = sphi 0, %s45
      %s34 = sphi 0, %s41
      %s35 = sphi 0, %s33
      %s36 = sphi 0, %s34
      %s37 = sphi 0, %s35
      %s38 = sphi 0, %s36
      %s50 = sphi 0, %s52
      %s53 = sphi 0, %s50
      %s54 = sphi 0, %s53
      %s70 = sphi 0, %s54
      %s74 = sphi 0, %s74
      %s76 = sphi 0, %s74
      %s77 = sphi 0, %s76
      %s91 = sphi 0, %s77
      %s95 = sphi 0, %s95
      %s97 = sphi 0, %s95
      %s98 = sphi 0, %s97
      %s112 = sphi 0, %s98
      %s116 = sphi 0, %s116
      %s118 = sphi 0, %s116
      %s119 = sphi 0, %s118
      %s133 = sphi 0, %s119
      %s137 = sphi 0, %s137
      %s139 = sphi 0, %s137
      %s140 = sphi 0, %s139
      %s154 = sphi 0, %s140
      %s162 = sphi 0, %s164
      %s165 = sphi 0, %s162
      %s166 = sphi 0, %s165
      %s182 = sphi 0, %s166
      %s190 = sphi 0, %s192
      %s193 = sphi 0, %s190
      %s194 = sphi 0, %s193
      %s210 = sphi 0, %s194
      %s218 = sphi 0, %s220
      %s221 = sphi 0, %s218
      %s222 = sphi 0, %s221
      %s238 = sphi 0, %s222
      %s246 = sphi 0, %s248
      %s249 = sphi 0, %s246
      %s250 = sphi 0, %s249
      %s266 = sphi 0, %s250
      %s274 = sphi 0, %s276
      %s277 = sphi 0, %s274
      %s278 = sphi 0, %s277
      %s294 = sphi 0, %s278
      %s300 = sphi 0, %s302
      %s303 = sphi 0, %s300
      %s304 = sphi 0, %s303
      %s320 = sphi 0, %s304
    $region4: #{tpu_custom_call.1} parent=1 // loop_header_branch
      %29 = sbr.rel (%p27) target = $region8
    $region5: #{tpu_custom_call.1} parent=1 // loop_body
      %s31 = ssub.s32 %s26, 1
      %s32 = ssub.s32 %s26, 2
      %s39 = sadd.s32 1, %s34
      %p40 = scmp.ge.s32.totalorder %s39, 1
      %s41 = scalar_select %p40, 0, %s39
      %s42 = sadd.s32 1, %s33
      %s43 = scalar_select %p40, %s42, %s33
      %p44 = scmp.ge.s32.totalorder %s43, 2
      %s45 = scalar_select %p44, 0, %s43
      %s46 = ssub.s32 %s33, %s45
      %s47 = ssub.s32 %s34, %s41
      %s48 = sor.u32 %s46, %s47
      %p49 = scmp.eq.s32.totalorder %s48, 0
      %s51 = sadd.s32 %s50, 1
      %s52 = scalar_select %p49, %s50, %s51
      %p55 = pneg %p49
      %p56 = scmp.eq.s32.totalorder %s26, 1
      %p57 = por %p55, %p56
      %p58 = scmp.ne.s32.totalorder %s50, %s53
      %p59 = scmp.eq.s32.totalorder %s26, 0
      %p60 = por %p58, %p59
      %p61 = scmp.ne.s32.totalorder %s50, %s53
      %p62 = scmp.eq.s32.totalorder %s31, 1
      %p63 = por %p61, %p62
      %p64 = scmp.ne.s32.totalorder %s53, %s54
      %p65 = scmp.eq.s32.totalorder %s31, 0
      %p66 = por %p64, %p65
      %p67 = scmp.ne.s32.totalorder %s53, %s54
      %p68 = scmp.eq.s32.totalorder %s32, 1
      %p69 = por %p67, %p68
      %p71 = scmp.ne.s32.totalorder %s54, %s70
      %p72 = scmp.eq.s32.totalorder %s32, 0
      %p73 = por %p71, %p72
      %s75 = sadd.s32 %s74, 1
      %p78 = scmp.eq.s32.totalorder %s26, 1
      %p79 = scmp.ne.s32.totalorder %s74, %s76
      %p80 = scmp.eq.s32.totalorder %s26, 0
      %p81 = por %p79, %p80
      %p82 = scmp.ne.s32.totalorder %s74, %s76
      %p83 = scmp.eq.s32.totalorder %s31, 1
      %p84 = por %p82, %p83
      %p85 = scmp.ne.s32.totalorder %s76, %s77
      %p86 = scmp.eq.s32.totalorder %s31, 0
      %p87 = por %p85, %p86
      %p88 = scmp.ne.s32.totalorder %s76, %s77
      %p89 = scmp.eq.s32.totalorder %s32, 1
      %p90 = por %p88, %p89
      %p92 = scmp.ne.s32.totalorder %s77, %s91
      %p93 = scmp.eq.s32.totalorder %s32, 0
      %p94 = por %p92, %p93
      %s96 = sadd.s32 %s95, 1
      %p99 = scmp.eq.s32.totalorder %s26, 1
      %p100 = scmp.ne.s32.totalorder %s95, %s97
      %p101 = scmp.eq.s32.totalorder %s26, 0
      %p102 = por %p100, %p101
      %p103 = scmp.ne.s32.totalorder %s95, %s97
      %p104 = scmp.eq.s32.totalorder %s31, 1
      %p105 = por %p103, %p104
      %p106 = scmp.ne.s32.totalorder %s97, %s98
      %p107 = scmp.eq.s32.totalorder %s31, 0
      %p108 = por %p106, %p107
      %p109 = scmp.ne.s32.totalorder %s97, %s98
      %p110 = scmp.eq.s32.totalorder %s32, 1
      %p111 = por %p109, %p110
      %p113 = scmp.ne.s32.totalorder %s98, %s112
      %p114 = scmp.eq.s32.totalorder %s32, 0
      %p115 = por %p113, %p114
      %s117 = sadd.s32 %s116, 1
      %p120 = scmp.eq.s32.totalorder %s26, 1
      %p121 = scmp.ne.s32.totalorder %s116, %s118
      %p122 = scmp.eq.s32.totalorder %s26, 0
      %p123 = por %p121, %p122
      %p124 = scmp.ne.s32.totalorder %s116, %s118
      %p125 = scmp.eq.s32.totalorder %s31, 1
      %p126 = por %p124, %p125
      %p127 = scmp.ne.s32.totalorder %s118, %s119
      %p128 = scmp.eq.s32.totalorder %s31, 0
      %p129 = por %p127, %p128
      %p130 = scmp.ne.s32.totalorder %s118, %s119
      %p131 = scmp.eq.s32.totalorder %s32, 1
      %p132 = por %p130, %p131
      %p134 = scmp.ne.s32.totalorder %s119, %s133
      %p135 = scmp.eq.s32.totalorder %s32, 0
      %p136 = por %p134, %p135
      %s138 = sadd.s32 %s137, 1
      %p141 = scmp.eq.s32.totalorder %s26, 1
      %p142 = scmp.ne.s32.totalorder %s137, %s139
      %p143 = scmp.eq.s32.totalorder %s26, 0
      %p144 = por %p142, %p143
      %p145 = scmp.ne.s32.totalorder %s137, %s139
      %p146 = scmp.eq.s32.totalorder %s31, 1
      %p147 = por %p145, %p146
      %p148 = scmp.ne.s32.totalorder %s139, %s140
      %p149 = scmp.eq.s32.totalorder %s31, 0
      %p150 = por %p148, %p149
      %p151 = scmp.ne.s32.totalorder %s139, %s140
      %p152 = scmp.eq.s32.totalorder %s32, 1
      %p153 = por %p151, %p152
      %p155 = scmp.ne.s32.totalorder %s140, %s154
      %p156 = scmp.eq.s32.totalorder %s32, 0
      %p157 = por %p155, %p156
      %s158 = ssub.s32 %s33, %s45
      %s159 = ssub.s32 %s34, %s41
      %s160 = sor.u32 %s158, %s159
      %p161 = scmp.eq.s32.totalorder %s160, 0
      %s163 = sadd.s32 %s162, 1
      %s164 = scalar_select %p161, %s162, %s163
      %p167 = pneg %p161
      %p168 = scmp.eq.s32.totalorder %s26, 1
      %p169 = por %p167, %p168
      %p170 = scmp.ne.s32.totalorder %s162, %s165
      %p171 = scmp.eq.s32.totalorder %s26, 0
      %p172 = por %p170, %p171
      %p173 = scmp.ne.s32.totalorder %s162, %s165
      %p174 = scmp.eq.s32.totalorder %s31, 1
      %p175 = por %p173, %p174
      %p176 = scmp.ne.s32.totalorder %s165, %s166
      %p177 = scmp.eq.s32.totalorder %s31, 0
      %p178 = por %p176, %p177
      %p179 = scmp.ne.s32.totalorder %s165, %s166
      %p180 = scmp.eq.s32.totalorder %s32, 1
      %p181 = por %p179, %p180
      %p183 = scmp.ne.s32.totalorder %s166, %s182
      %p184 = scmp.eq.s32.totalorder %s32, 0
      %p185 = por %p183, %p184
      %s186 = ssub.s32 %s33, %s45
      %s187 = ssub.s32 %s34, %s41
      %s188 = sor.u32 %s186, %s187
      %p189 = scmp.eq.s32.totalorder %s188, 0
      %s191 = sadd.s32 %s190, 1
      %s192 = scalar_select %p189, %s190, %s191
      %p195 = pneg %p189
      %p196 = scmp.eq.s32.totalorder %s26, 1
      %p197 = por %p195, %p196
      %p198 = scmp.ne.s32.totalorder %s190, %s193
      %p199 = scmp.eq.s32.totalorder %s26, 0
      %p200 = por %p198, %p199
      %p201 = scmp.ne.s32.totalorder %s190, %s193
      %p202 = scmp.eq.s32.totalorder %s31, 1
      %p203 = por %p201, %p202
      %p204 = scmp.ne.s32.totalorder %s193, %s194
      %p205 = scmp.eq.s32.totalorder %s31, 0
      %p206 = por %p204, %p205
      %p207 = scmp.ne.s32.totalorder %s193, %s194
      %p208 = scmp.eq.s32.totalorder %s32, 1
      %p209 = por %p207, %p208
      %p211 = scmp.ne.s32.totalorder %s194, %s210
      %p212 = scmp.eq.s32.totalorder %s32, 0
      %p213 = por %p211, %p212
      %s214 = ssub.s32 %s33, %s45
      %s215 = ssub.s32 %s34, %s41
      %s216 = sor.u32 %s214, %s215
      %p217 = scmp.eq.s32.totalorder %s216, 0
      %s219 = sadd.s32 %s218, 1
      %s220 = scalar_select %p217, %s218, %s219
      %p223 = pneg %p217
      %p224 = scmp.eq.s32.totalorder %s26, 1
      %p225 = por %p223, %p224
      %p226 = scmp.ne.s32.totalorder %s218, %s221
      %p227 = scmp.eq.s32.totalorder %s26, 0
      %p228 = por %p226, %p227
      %p229 = scmp.ne.s32.totalorder %s218, %s221
      %p230 = scmp.eq.s32.totalorder %s31, 1
      %p231 = por %p229, %p230
      %p232 = scmp.ne.s32.totalorder %s221, %s222
      %p233 = scmp.eq.s32.totalorder %s31, 0
      %p234 = por %p232, %p233
      %p235 = scmp.ne.s32.totalorder %s221, %s222
      %p236 = scmp.eq.s32.totalorder %s32, 1
      %p237 = por %p235, %p236
      %p239 = scmp.ne.s32.totalorder %s222, %s238
      %p240 = scmp.eq.s32.totalorder %s32, 0
      %p241 = por %p239, %p240
      %s242 = ssub.s32 %s33, %s45
      %s243 = ssub.s32 %s34, %s41
      %s244 = sor.u32 %s242, %s243
      %p245 = scmp.eq.s32.totalorder %s244, 0
      %s247 = sadd.s32 %s246, 1
      %s248 = scalar_select %p245, %s246, %s247
      %p251 = pneg %p245
      %p252 = scmp.eq.s32.totalorder %s26, 1
      %p253 = por %p251, %p252
      %p254 = scmp.ne.s32.totalorder %s246, %s249
      %p255 = scmp.eq.s32.totalorder %s26, 0
      %p256 = por %p254, %p255
      %p257 = scmp.ne.s32.totalorder %s246, %s249
      %p258 = scmp.eq.s32.totalorder %s31, 1
      %p259 = por %p257, %p258
      %p260 = scmp.ne.s32.totalorder %s249, %s250
      %p261 = scmp.eq.s32.totalorder %s31, 0
      %p262 = por %p260, %p261
      %p263 = scmp.ne.s32.totalorder %s249, %s250
      %p264 = scmp.eq.s32.totalorder %s32, 1
      %p265 = por %p263, %p264
      %p267 = scmp.ne.s32.totalorder %s250, %s266
      %p268 = scmp.eq.s32.totalorder %s32, 0
      %p269 = por %p267, %p268
      %s270 = ssub.s32 %s33, %s45
      %s271 = ssub.s32 %s34, %s41
      %s272 = sor.u32 %s270, %s271
      %p273 = scmp.eq.s32.totalorder %s272, 0
      %s275 = sadd.s32 %s274, 1
      %s276 = scalar_select %p273, %s274, %s275
      %p279 = pneg %p273
      %p280 = scmp.eq.s32.totalorder %s26, 1
      %p281 = por %p279, %p280
      %p282 = scmp.ne.s32.totalorder %s274, %s277
      %p283 = scmp.eq.s32.totalorder %s26, 0
      %p284 = por %p282, %p283
      %p285 = scmp.ne.s32.totalorder %s274, %s277
      %p286 = scmp.eq.s32.totalorder %s31, 1
      %p287 = por %p285, %p286
      %p288 = scmp.ne.s32.totalorder %s277, %s278
      %p289 = scmp.eq.s32.totalorder %s31, 0
      %p290 = por %p288, %p289
      %p291 = scmp.ne.s32.totalorder %s277, %s278
      %p292 = scmp.eq.s32.totalorder %s32, 1
      %p293 = por %p291, %p292
      %p295 = scmp.ne.s32.totalorder %s278, %s294
      %p296 = scmp.eq.s32.totalorder %s32, 0
      %p297 = por %p295, %p296
      %s298 = ssub.s32 %s33, %s45
      %p299 = scmp.eq.s32.totalorder %s298, 0
      %s301 = sadd.s32 %s300, 1
      %s302 = scalar_select %p299, %s300, %s301
      %p305 = pneg %p299
      %p306 = scmp.eq.s32.totalorder %s26, 1
      %p307 = por %p305, %p306
      %p308 = scmp.ne.s32.totalorder %s300, %s303
      %p309 = scmp.eq.s32.totalorder %s26, 0
      %p310 = por %p308, %p309
      %p311 = scmp.ne.s32.totalorder %s300, %s303
      %p312 = scmp.eq.s32.totalorder %s31, 1
      %p313 = por %p311, %p312
      %p314 = scmp.ne.s32.totalorder %s303, %s304
      %p315 = scmp.eq.s32.totalorder %s31, 0
      %p316 = por %p314, %p315
      %p317 = scmp.ne.s32.totalorder %s303, %s304
      %p318 = scmp.eq.s32.totalorder %s32, 1
      %p319 = por %p317, %p318
      %p321 = scmp.ne.s32.totalorder %s304, %s320
      %p322 = scmp.eq.s32.totalorder %s32, 0
      %p323 = por %p321, %p322
      %p324 = scmp.le.s32.totalorder 1, %s26
      %p325 = scmp.lt.s32.totalorder %s26, 3
      %p326 = pnand %p324, %p325
      %p327 = pneg %p326
      // Predicated region
      $region9: #{tpu_custom_call.1} parent=5 // pred_check
        _
      $region10: #{tpu_custom_call.1} parent=5 // pred_check_branch
        %329 = sbr.rel (%p326) target = $region12
      $region11: #{tpu_custom_call.1} parent=5 // pred_region
        %s330 = ssub.s32 %s26, 1
        // Predicated region
        $region13: #{tpu_custom_call.1} parent=11 // pred_check
          %p331 = pneg %p87
        $region14: #{tpu_custom_call.1} parent=11 // pred_check_branch
          %333 = sbr.rel (%p331) target = $region16
        $region15: #{tpu_custom_call.1} parent=11 // pred_region
          _
        $region16: #{tpu_custom_call.1} parent=11 // pred_fallthru
          _
        // Predicated region
        $region17: #{tpu_custom_call.1} parent=11 // pred_check
          %p334 = pneg %p108
        $region18: #{tpu_custom_call.1} parent=11 // pred_check_branch
          %336 = sbr.rel (%p334) target = $region20
        $region19: #{tpu_custom_call.1} parent=11 // pred_region
          _
        $region20: #{tpu_custom_call.1} parent=11 // pred_fallthru
          _
        // Predicated region
        $region21: #{tpu_custom_call.1} parent=11 // pred_check
          %p337 = pneg %p129
        $region22: #{tpu_custom_call.1} parent=11 // pred_check_branch
          %339 = sbr.rel (%p337) target = $region24
        $region23: #{tpu_custom_call.1} parent=11 // pred_region
          _
        $region24: #{tpu_custom_call.1} parent=11 // pred_fallthru
          _
        // Predicated region
        $region25: #{tpu_custom_call.1} parent=11 // pred_check
          %p340 = pneg %p150
        $region26: #{tpu_custom_call.1} parent=11 // pred_check_branch
          %342 = sbr.rel (%p340) target = $region28
        $region27: #{tpu_custom_call.1} parent=11 // pred_region
          _
        $region28: #{tpu_custom_call.1} parent=11 // pred_fallthru
          _
      $region12: #{tpu_custom_call.1} parent=5 // pred_fallthru
        _
      %p343 = scmp.lt.s32.totalorder %s26, 2
      // Predicated region
      $region29: #{tpu_custom_call.1} parent=5 // pred_check
        %p344 = pneg %p343
      $region30: #{tpu_custom_call.1} parent=5 // pred_check_branch
        %346 = sbr.rel (%p344) target = $region32
      $region31: #{tpu_custom_call.1} parent=5 // pred_region
        // Predicated region
        $region33: #{tpu_custom_call.1} parent=31 // pred_check
          %p347 = pneg %p60
        $region34: #{tpu_custom_call.1} parent=31 // pred_check_branch
          %349 = sbr.rel (%p347) target = $region36
        $region35: #{tpu_custom_call.1} parent=31 // pred_region
          %p350 = scmp.lt.s32.totalorder %s33, 1
          %s351 = scalar_select %p350, %s33, 1
          %p352 = scmp.lt.s32.totalorder %s34, 0
          %s353 = scalar_select %p352, %s34, 0
          %s354 = sadd.s32 %s353, %s351
          %s355 = smul.addr %s354, 8
          %s356 = scalar_lea.vmem %s0, %s355
        $region36: #{tpu_custom_call.1} parent=31 // pred_fallthru
          _
      $region32: #{tpu_custom_call.1} parent=5 // pred_fallthru
        _
      %p357 = scmp.le.s32.totalorder 1, %s26
      %p358 = scmp.lt.s32.totalorder %s26, 3
      %p359 = pnand %p357, %p358
      %p360 = pneg %p359
      // Predicated region
      $region37: #{tpu_custom_call.1} parent=5 // pred_check
        _
      $region38: #{tpu_custom_call.1} parent=5 // pred_check_branch
        %362 = sbr.rel (%p359) target = $region40
      $region39: #{tpu_custom_call.1} parent=5 // pred_region
        %s363 = ssub.s32 %s26, 1
        %p364 = scmp.lt.s32.totalorder %s35, 1
        %s365 = scalar_select %p364, %s35, 1
        %p366 = scmp.lt.s32.totalorder %s36, 0
        %s367 = scalar_select %p366, %s36, 0
        %s368 = sadd.s32 %s367, %s365
        %s369 = smul.addr %s368, 8
        %s370 = scalar_lea.vmem %s0, %s369
        %p371 = pneg %p66
        %p372 = pneg %p63
        %p373 = pneg %p87
        %p374 = pneg %p84
        %p375 = pneg %p108
        %p376 = pneg %p105
        %p377 = pneg %p129
        %p378 = pneg %p126
        %p379 = pneg %p150
        %p380 = pneg %p147
        %p381 = pneg %p178
        %p382 = pneg %p175
        %s383 = sand.u32 %s165, 1
        %s384 = scalar_lea.sflag [#allocation3], %s383
        %s385 = sand.u32 %s165, 1
        %s386 = smul.addr %s385, 8
        %s387 = scalar_lea.vmem [#allocation2], %s386
        %p388 = pneg %p206
        %p389 = pneg %p203
        %s390 = sand.u32 %s31, 1
        %s391 = scalar_lea.sflag [#allocation5], %s390
        %s392 = sand.u32 %s193, 1
        %s393 = smul.addr %s392, 8
        %s394 = scalar_lea.vmem [#allocation4], %s393
        %p395 = pneg %p234
        %p396 = pneg %p231
        %s397 = sand.u32 %s31, 1
        %s398 = scalar_lea.sflag [#allocation5], %s397
        %s399 = sand.u32 %s221, 1
        %s400 = smul.addr %s399, 8
        %s401 = scalar_lea.vmem [#allocation6], %s400
        %p402 = pneg %p262
        %p403 = pneg %p259
        %s404 = sand.u32 %s31, 1
        %s405 = scalar_lea.sflag [#allocation8], %s404
        %s406 = sand.u32 %s249, 1
        %s407 = smul.addr %s406, 8
        %s408 = scalar_lea.vmem [#allocation7], %s407
        %p409 = pneg %p290
        %p410 = pneg %p287
        %s411 = sand.u32 %s31, 1
        %s412 = scalar_lea.sflag [#allocation8], %s411
        %s413 = sand.u32 %s277, 1
        %s414 = smul.addr %s413, 8
        %s415 = scalar_lea.vmem [#allocation9], %s414
        %p416 = pneg %p316
        %p417 = pneg %p313
        %p418 = scmp.lt.s32.totalorder %s35, 1
        %s419 = scalar_select %p418, %s35, 1
        %s420 = scalar_lea.vmem %s10, %s419
        %p421 = scmp.lt.s32.totalorder %s35, 1
        %s422 = scalar_select %p421, %s35, 1
        %p423 = scmp.lt.s32.totalorder %s36, 0
        %s424 = scalar_select %p423, %s36, 0
        %s425 = sadd.s32 %s424, %s422
        %s426 = smul.addr %s425, 8
        %s427 = scalar_lea.vmem %s0, %s426
        %p428 = scmp.lt.s32.totalorder %s35, 1
        %s429 = scalar_select %p428, %s35, 1
        %s430 = scalar_lea.vmem %s10, %s429
        %v432 = vld [vmem:[%s427] sm:$0xff]
        %v433 = vpack.c.bf16 %v432, %v432
        %v434 = vld [vmem:[%s4] sm:$0xf]
        %v435 = vld [vmem:[%s4 + $0x4] sm:$0xf]
        %v436 = vld [vmem:[%s4 + $0x8] sm:$0xf]
        %v437 = vld [vmem:[%s4 + $0xc] sm:$0xf]
        %v442 = vunpack.c.l.b16 %v434
        %v443 = vunpack.c.l.b16 %v435
        %v444 = vunpack.c.l.b16 %v436
        %v445 = vunpack.c.l.b16 %v437
        %v446 = vpack.c.b16 %v443, %v442
        %v447 = vpack.c.b16 %v445, %v444
        %vm450 = vcmask 261120
        %v452 = vsel %vm450, %v433, 0
        %454 = vmatpush.bf16.msra.mxu0 0
        %455 = vmatpush.bf16.msra.mxu0 0
        %456 = vmatpush.bf16.msra.mxu0 0
        %457 = vmatpush.bf16.msra.mxu0 0
        %458 = vmatpush.bf16.msra.mxu0 0
        %459 = vmatpush.bf16.msra.mxu0 0
        %460 = vmatpush.bf16.msra.mxu0 %v447
        %461 = vmatpush.bf16.msra.mxu0 %v446
        %462 = vmatmul.bf16.gmra.mxu0 %v452
        %v463 = vpop.f32.mrf.mxu0
        %v464 = vadd.f32 0.0, %v463
        %v465 = vpop.f32.mrf.mxu0
        %466 = vdwg.mxu0
        %v467 = vld [vmem:[%s1] sm:$0xf]
        %v468 = vld [vmem:[%s1 + $0x4] sm:$0xf]
        %v469 = vld [vmem:[%s1 + $0x8] sm:$0xf]
        %v470 = vld [vmem:[%s1 + $0xc] sm:$0xf]
        %v475 = vunpack.c.l.b16 %v467
        %v476 = vunpack.c.l.b16 %v468
        %v477 = vunpack.c.l.b16 %v469
        %v478 = vunpack.c.l.b16 %v470
        %v479 = vpack.c.b16 %v476, %v475
        %v480 = vpack.c.b16 %v478, %v477
        %483 = vmatpush.bf16.msra.mxu0 0
        %484 = vmatpush.bf16.msra.mxu0 0
        %485 = vmatpush.bf16.msra.mxu0 0
        %486 = vmatpush.bf16.msra.mxu0 0
        %487 = vmatpush.bf16.msra.mxu0 0
        %488 = vmatpush.bf16.msra.mxu0 0
        %489 = vmatpush.bf16.msra.mxu0 %v480
        %490 = vmatpush.bf16.msra.mxu0 %v479
        %491 = vmatmul.bf16.gmra.mxu0 %v452
        %v492 = vpop.f32.mrf.mxu0
        %v493 = vadd.f32 0.0, %v492
        %v494 = vpop.f32.mrf.mxu0
        %495 = vdwg.mxu0
        %v496 = vmul.f32 %v493, 2.0
        %v497 = vld [vmem:[%s3] sm:$0x1]
        %v499 = vperm.slane %v497, 0
        %v501 = vsub.f32 %v496, %v499
        %502 = vmax.xlane.f32.xlu0 %v501
        %v503 = vpop.xlane.xlu0 %502
        %v504 = vsub.f32 %v501, %v503
        %v505 = vmul.f32 %v504, 1.442695
        %v506 = vpow.pop %v505
        %507 = vadd.xlane.f32.xlu0 %v506
        %v508 = vpop.xlane.xlu0 %507
        %v509 = vrcp.pop %v508
        %v510 = vmul.f32 %v508, %v509
        %v511 = vsub.f32 1.0, %v510
        %v512 = vmul.f32 %v509, %v511
        %v513 = vadd.f32 %v509, %v512
        %vm514 = vweird.f32 %v508
        %vm515 = vweird.f32 %v509
        %vm516 = vmor %vm514, %vm515
        %v517 = vsel %vm516, %v509, %v513
        %v518 = vand.u32 2147483647, %v508
        %vm519 = vcmp.eq.f32.partialorder %v518, 8.507059e+37
        %v520 = vand.u32 %v508, 2147483648
        %v521 = vor.u32 1.1754944e-38, %v520
        %v522 = vsel %vm519, %v521, %v517
        %v523 = vmul.f32 %v506, %v522
        %v524 = vpack.c.bf16 %v523, %v523
        %v525 = vld [vmem:[%s2] sm:$0xf]
        %v526 = vld [vmem:[%s2 + $0x4] sm:$0xf]
        %v527 = vld [vmem:[%s2 + $0x8] sm:$0xf]
        %v528 = vld [vmem:[%s2 + $0xc] sm:$0xf]
        %v529 = vld [vmem:[%s2 + $0x10] sm:$0xf]
        %v530 = vld [vmem:[%s2 + $0x14] sm:$0xf]
        %v531 = vld [vmem:[%s2 + $0x18] sm:$0xf]
        %v532 = vld [vmem:[%s2 + $0x1c] sm:$0xf]
        %v533 = vld [vmem:[%s2 + $0x20] sm:$0xf]
        %v534 = vld [vmem:[%s2 + $0x24] sm:$0xf]
        %v535 = vld [vmem:[%s2 + $0x28] sm:$0xf]
        %v536 = vld [vmem:[%s2 + $0x2c] sm:$0xf]
        %v537 = vld [vmem:[%s2 + $0x30] sm:$0xf]
        %v538 = vld [vmem:[%s2 + $0x34] sm:$0xf]
        %v539 = vld [vmem:[%s2 + $0x38] sm:$0xf]
        %v540 = vld [vmem:[%s2 + $0x3c] sm:$0xf]
        %v557 = vunpack.c.l.b16 %v525
        %v558 = vunpack.c.l.b16 %v526
        %v559 = vunpack.c.l.b16 %v527
        %v560 = vunpack.c.l.b16 %v528
        %v561 = vunpack.c.l.b16 %v529
        %v562 = vunpack.c.l.b16 %v530
        %v563 = vunpack.c.l.b16 %v531
        %v564 = vunpack.c.l.b16 %v532
        %v565 = vunpack.c.l.b16 %v533
        %v566 = vunpack.c.l.b16 %v534
        %v567 = vunpack.c.l.b16 %v535
        %v568 = vunpack.c.l.b16 %v536
        %v569 = vunpack.c.l.b16 %v537
        %v570 = vunpack.c.l.b16 %v538
        %v571 = vunpack.c.l.b16 %v539
        %v572 = vunpack.c.l.b16 %v540
        %v573 = vpack.c.b16 %v558, %v557
        %v574 = vpack.c.b16 %v560, %v559
        %v575 = vpack.c.b16 %v562, %v561
        %v576 = vpack.c.b16 %v564, %v563
        %v577 = vpack.c.b16 %v566, %v565
        %v578 = vpack.c.b16 %v568, %v567
        %v579 = vpack.c.b16 %v570, %v569
        %v580 = vpack.c.b16 %v572, %v571
        %589 = vmatpush.bf16.msra.mxu0 %v580
        %590 = vmatpush.bf16.msra.mxu0 %v579
        %591 = vmatpush.bf16.msra.mxu0 %v578
        %592 = vmatpush.bf16.msra.mxu0 %v577
        %593 = vmatpush.bf16.msra.mxu0 %v576
        %594 = vmatpush.bf16.msra.mxu0 %v575
        %595 = vmatpush.bf16.msra.mxu0 %v574
        %596 = vmatpush.bf16.msra.mxu0 %v573
        %597 = vmatmul.bf16.gmra.mxu0 %v524
        %v598 = vpop.f32.mrf.mxu0
        %v599 = vadd.f32 0.0, %v598
        %v600 = vpop.f32.mrf.mxu0
        %601 = vdwg.mxu0
        %v602 = vsub.f32 %v599, %v432
        %p603 = scmp.eq.s32.totalorder %s36, 0
        // Predicated region
        $region41: #{tpu_custom_call.1} parent=39 // pred_check
          %p604 = pneg %p603
        $region42: #{tpu_custom_call.1} parent=39 // pred_check_branch
          %606 = sbr.rel (%p604) target = $region44
        $region43: #{tpu_custom_call.1} parent=39 // pred_region
          %vm607 = vcmask 0
          %608 = vst.msk [vmem:[%s430] sm:$0x1] %vm607, 0.0
        $region44: #{tpu_custom_call.1} parent=39 // pred_fallthru
          _
        %v609 = vld [vmem:[%s430] sm:$0x1]
        %v610 = vmul.f32 %v602, %v602
        %v611 = vsel %vm450, %v610, 0.0
        %612 = vadd.xlane.f32.xlu0 %v611
        %v613 = vpop.xlane.xlu0 %612
        %v614 = vrot.slane %v613, 4
        %v615 = vadd.f32 %v613, %v614
        %v616 = vrot.slane %v615, 2
        %v617 = vadd.f32 %v615, %v616
        %v618 = vrot.slane %v617, 1
        %v619 = vadd.f32 %v617, %v618
        %s620 = vtos %v619
        %v621 = vstv %s620
        %v622 = vadd.f32 %v609, %v621
        %vm623 = vcmask 0
        %624 = vst.msk [vmem:[%s430] sm:$0x1] %vm623, %v622
        %v625 = vpack.c.bf16 %v599, %v599
        %v626 = vld [vmem:[%s4] sm:$0xf]
        %v627 = vld [vmem:[%s4 + $0x4] sm:$0xf]
        %v628 = vld [vmem:[%s4 + $0x8] sm:$0xf]
        %v629 = vld [vmem:[%s4 + $0xc] sm:$0xf]
        %v634 = vunpack.c.l.b16 %v626
        %v635 = vunpack.c.l.b16 %v627
        %v636 = vunpack.c.l.b16 %v628
        %v637 = vunpack.c.l.b16 %v629
        %v638 = vpack.c.b16 %v635, %v634
        %v639 = vpack.c.b16 %v637, %v636
        %640 = vrot.lane.b32.xlu0 %v638, 96
        %v641 = vpop.permute.xlu0 %640
        %642 = vrot.lane.b32.xlu0 %v639, 96
        %v643 = vpop.permute.xlu0 %642
        %v647 = vsel %vm450, %v625, 0
        %649 = vmatpush.bf16.msra.mxu0 0
        %650 = vmatpush.bf16.msra.mxu0 0
        %651 = vmatpush.bf16.msra.mxu0 0
        %652 = vmatpush.bf16.msra.mxu0 0
        %653 = vmatpush.bf16.msra.mxu0 0
        %654 = vmatpush.bf16.msra.mxu0 0
        %655 = vmatpush.bf16.msra.mxu0 %v643
        %656 = vmatpush.bf16.msra.mxu0 %v641
        %657 = vmatmul.bf16.gmra.mxu0 %v647
        %v658 = vpop.f32.mrf.mxu0
        %v659 = vadd.f32 0.0, %v658
        %v660 = vpop.f32.mrf.mxu0
        %661 = vdwg.mxu0
        %v662 = vpack.c.bf16 %v464, %v464
        %vm663 = vcmask 125952
        %664 = vst.msk [vmem:[%s387] sm:$0xf] %vm663, %v662
        %666 = vrot.lane.b32.xlu0 %v662, 96
        %v667 = vpop.permute.xlu0 %666
        %669 = vst.msk [vmem:[%s394] sm:$0xf] %vm663, %v667
        %670 = vrot.lane.b32.xlu0 %v662, 64
        %v671 = vpop.permute.xlu0 %670
        %673 = vst.msk [vmem:[%s401] sm:$0xf] %vm663, %v671
        %v674 = vpack.c.bf16 %v659, %v659
        %675 = vst.msk [vmem:[%s408] sm:$0xf] %vm663, %v674
        %677 = vrot.lane.b32.xlu0 %v674, 96
        %v678 = vpop.permute.xlu0 %677
        %680 = vst.msk [vmem:[%s415] sm:$0xf] %vm663, %v678
        %681 = vrot.lane.b32.xlu0 %v662, 112
        %v682 = vpop.permute.xlu0 %681
        %s684 = scalar_lea.vmem %s387, 4 [#allocation2]
        %685 = vst.msk [vmem:[%s684] sm:$0xf] %vm663, %v682
        %686 = vrot.lane.b32.xlu0 %v662, 80
        %v687 = vpop.permute.xlu0 %686
        %s689 = scalar_lea.vmem %s394, 4 [#allocation4]
        %690 = vst.msk [vmem:[%s689] sm:$0xf] %vm663, %v687
        %691 = vrot.lane.b32.xlu0 %v662, 48
        %v692 = vpop.permute.xlu0 %691
        %s694 = scalar_lea.vmem %s401, 4 [#allocation6]
        %695 = vst.msk [vmem:[%s694] sm:$0xf] %vm663, %v692
        %696 = vrot.lane.b32.xlu0 %v674, 112
        %v697 = vpop.permute.xlu0 %696
        %s699 = scalar_lea.vmem %s408, 4 [#allocation7]
        %700 = vst.msk [vmem:[%s699] sm:$0xf] %vm663, %v697
        %701 = vrot.lane.b32.xlu0 %v674, 80
        %v702 = vpop.permute.xlu0 %701
        %s704 = scalar_lea.vmem %s415, 4 [#allocation9]
        %705 = vst.msk [vmem:[%s704] sm:$0xf] %vm663, %v702
        %s706 = sand.u32 %s165, 1
        %s707 = scalar_lea.sflag [#allocation3], %s706
        %s708 = sand.u32 %s165, 1
        %s709 = smul.addr %s708, 8
        %s710 = scalar_lea.vmem [#allocation2], %s709
        %s711 = sand.u32 %s31, 1
        %s712 = scalar_lea.sflag [#allocation5], %s711
        %s713 = sand.u32 %s193, 1
        %s714 = smul.addr %s713, 8
        %s715 = scalar_lea.vmem [#allocation4], %s714
        %s716 = sand.u32 %s31, 1
        %s717 = scalar_lea.sflag [#allocation5], %s716
        %s718 = sand.u32 %s221, 1
        %s719 = smul.addr %s718, 8
        %s720 = scalar_lea.vmem [#allocation6], %s719
        %s721 = sand.u32 %s31, 1
        %s722 = scalar_lea.sflag [#allocation8], %s721
        %s723 = sand.u32 %s249, 1
        %s724 = smul.addr %s723, 8
        %s725 = scalar_lea.vmem [#allocation7], %s724
        %s726 = sand.u32 %s31, 1
        %s727 = scalar_lea.sflag [#allocation8], %s726
        %s728 = sand.u32 %s277, 1
        %s729 = smul.addr %s728, 8
        %s730 = scalar_lea.vmem [#allocation9], %s729
        %p731 = scmp.lt.s32.totalorder %s35, 1
        %s732 = scalar_select %p731, %s35, 1
        %s733 = scalar_lea.vmem %s10, %s732
        // Predicated region
        $region45: #{tpu_custom_call.1} parent=39 // pred_check
          %p734 = pneg %p175
        $region46: #{tpu_custom_call.1} parent=39 // pred_check_branch
          %736 = sbr.rel (%p734) target = $region48
        $region47: #{tpu_custom_call.1} parent=39 // pred_region
          %738 = vsyncadd %s707, 0
          %s739 = smul.addr %s35, 2
          %s740 = sadd.s32 %s36, %s739
          %s741 = smul.addr %s740, 4
          %s742 = scalar_lea.hbm %s5, %s741
          %s743 = sshll.u32 %s710, 4
          %s744 = int_to_ptr.vmem [resolvable:$true] %s743
          %s745 = sshll.u32 %s742, 4
          %s746 = int_to_ptr.hbm [resolvable:$true] %s745
          %751 = dma.vmem_to_hbm [thread:$0]  %s744, 128, %s746, %s707, 64, 64, 4
        $region48: #{tpu_custom_call.1} parent=39 // pred_fallthru
          _
        // Predicated region
        $region49: #{tpu_custom_call.1} parent=39 // pred_check
          %p752 = pneg %p203
        $region50: #{tpu_custom_call.1} parent=39 // pred_check_branch
          %754 = sbr.rel (%p752) target = $region52
        $region51: #{tpu_custom_call.1} parent=39 // pred_region
          %756 = vsyncadd %s712, 0
          %s757 = smul.addr %s35, 2
          %s758 = sadd.s32 %s36, %s757
          %s759 = smul.addr %s758, 4
          %s760 = scalar_lea.hbm %s6, %s759
          %s761 = sshll.u32 %s715, 4
          %s762 = int_to_ptr.vmem [resolvable:$true] %s761
          %s763 = sshll.u32 %s760, 4
          %s764 = int_to_ptr.hbm [resolvable:$true] %s763
          %769 = dma.vmem_to_hbm [thread:$0]  %s762, 128, %s764, %s712, 64, 64, 4
        $region52: #{tpu_custom_call.1} parent=39 // pred_fallthru
          _
        // Predicated region
        $region53: #{tpu_custom_call.1} parent=39 // pred_check
          %p770 = pneg %p231
        $region54: #{tpu_custom_call.1} parent=39 // pred_check_branch
          %772 = sbr.rel (%p770) target = $region56
        $region55: #{tpu_custom_call.1} parent=39 // pred_region
          %774 = vsyncadd %s717, 0
          %s775 = smul.addr %s35, 2
          %s776 = sadd.s32 %s36, %s775
          %s777 = smul.addr %s776, 4
          %s778 = scalar_lea.hbm %s7, %s777
          %s779 = sshll.u32 %s720, 4
          %s780 = int_to_ptr.vmem [resolvable:$true] %s779
          %s781 = sshll.u32 %s778, 4
          %s782 = int_to_ptr.hbm [resolvable:$true] %s781
          %787 = dma.vmem_to_hbm [thread:$0]  %s780, 128, %s782, %s717, 64, 64, 4
        $region56: #{tpu_custom_call.1} parent=39 // pred_fallthru
          _
        // Predicated region
        $region57: #{tpu_custom_call.1} parent=39 // pred_check
          %p788 = pneg %p259
        $region58: #{tpu_custom_call.1} parent=39 // pred_check_branch
          %790 = sbr.rel (%p788) target = $region60
        $region59: #{tpu_custom_call.1} parent=39 // pred_region
          %792 = vsyncadd %s722, 0
          %s793 = smul.addr %s35, 2
          %s794 = sadd.s32 %s36, %s793
          %s795 = smul.addr %s794, 4
          %s796 = scalar_lea.hbm %s8, %s795
          %s797 = sshll.u32 %s725, 4
          %s798 = int_to_ptr.vmem [resolvable:$true] %s797
          %s799 = sshll.u32 %s796, 4
          %s800 = int_to_ptr.hbm [resolvable:$true] %s799
          %805 = dma.vmem_to_hbm [thread:$0]  %s798, 128, %s800, %s722, 64, 64, 4
        $region60: #{tpu_custom_call.1} parent=39 // pred_fallthru
          _
        // Predicated region
        $region61: #{tpu_custom_call.1} parent=39 // pred_check
          %p806 = pneg %p287
        $region62: #{tpu_custom_call.1} parent=39 // pred_check_branch
          %808 = sbr.rel (%p806) target = $region64
        $region63: #{tpu_custom_call.1} parent=39 // pred_region
          %810 = vsyncadd %s727, 0
          %s811 = smul.addr %s35, 2
          %s812 = sadd.s32 %s36, %s811
          %s813 = smul.addr %s812, 4
          %s814 = scalar_lea.hbm %s9, %s813
          %s815 = sshll.u32 %s730, 4
          %s816 = int_to_ptr.vmem [resolvable:$true] %s815
          %s817 = sshll.u32 %s814, 4
          %s818 = int_to_ptr.hbm [resolvable:$true] %s817
          %823 = dma.vmem_to_hbm [thread:$0]  %s816, 128, %s818, %s727, 64, 64, 4
        $region64: #{tpu_custom_call.1} parent=39 // pred_fallthru
          _
        // Predicated region
        $region65: #{tpu_custom_call.1} parent=39 // pred_check
          %p824 = pneg %p313
        $region66: #{tpu_custom_call.1} parent=39 // pred_check_branch
          %826 = sbr.rel (%p824) target = $region68
        $region67: #{tpu_custom_call.1} parent=39 // pred_region
          _
        $region68: #{tpu_custom_call.1} parent=39 // pred_fallthru
          _
      $region40: #{tpu_custom_call.1} parent=5 // pred_fallthru
        _
      %p827 = scmp.le.s32.totalorder 2, %s26
      // Predicated region
      $region69: #{tpu_custom_call.1} parent=5 // pred_check
        %p828 = pneg %p827
      $region70: #{tpu_custom_call.1} parent=5 // pred_check_branch
        %830 = sbr.rel (%p828) target = $region72
      $region71: #{tpu_custom_call.1} parent=5 // pred_region
        %s831 = ssub.s32 %s26, 2
        // Predicated region
        $region73: #{tpu_custom_call.1} parent=71 // pred_check
          %p832 = pneg %p181
        $region74: #{tpu_custom_call.1} parent=71 // pred_check_branch
          %834 = sbr.rel (%p832) target = $region76
        $region75: #{tpu_custom_call.1} parent=71 // pred_region
          %s835 = sand.u32 %s166, 1
          %s836 = scalar_lea.sflag [#allocation3], %s835
          %s837 = sand.u32 %s166, 1
          %s838 = smul.addr %s837, 8
          %s839 = scalar_lea.vmem [#allocation2], %s838
          %841 = dma.done %s836, 128
        $region76: #{tpu_custom_call.1} parent=71 // pred_fallthru
          _
        // Predicated region
        $region77: #{tpu_custom_call.1} parent=71 // pred_check
          %p842 = pneg %p209
        $region78: #{tpu_custom_call.1} parent=71 // pred_check_branch
          %844 = sbr.rel (%p842) target = $region80
        $region79: #{tpu_custom_call.1} parent=71 // pred_region
          %s845 = sand.u32 %s32, 1
          %s846 = scalar_lea.sflag [#allocation5], %s845
          %s847 = sand.u32 %s194, 1
          %s848 = smul.addr %s847, 8
          %s849 = scalar_lea.vmem [#allocation4], %s848
          %851 = dma.done %s846, 128
        $region80: #{tpu_custom_call.1} parent=71 // pred_fallthru
          _
        // Predicated region
        $region81: #{tpu_custom_call.1} parent=71 // pred_check
          %p852 = pneg %p237
        $region82: #{tpu_custom_call.1} parent=71 // pred_check_branch
          %854 = sbr.rel (%p852) target = $region84
        $region83: #{tpu_custom_call.1} parent=71 // pred_region
          %s855 = sand.u32 %s32, 1
          %s856 = scalar_lea.sflag [#allocation5], %s855
          %s857 = sand.u32 %s222, 1
          %s858 = smul.addr %s857, 8
          %s859 = scalar_lea.vmem [#allocation6], %s858
          %861 = dma.done %s856, 128
        $region84: #{tpu_custom_call.1} parent=71 // pred_fallthru
          _
        // Predicated region
        $region85: #{tpu_custom_call.1} parent=71 // pred_check
          %p862 = pneg %p265
        $region86: #{tpu_custom_call.1} parent=71 // pred_check_branch
          %864 = sbr.rel (%p862) target = $region88
        $region87: #{tpu_custom_call.1} parent=71 // pred_region
          %s865 = sand.u32 %s32, 1
          %s866 = scalar_lea.sflag [#allocation8], %s865
          %s867 = sand.u32 %s250, 1
          %s868 = smul.addr %s867, 8
          %s869 = scalar_lea.vmem [#allocation7], %s868
          %871 = dma.done %s866, 128
        $region88: #{tpu_custom_call.1} parent=71 // pred_fallthru
          _
        // Predicated region
        $region89: #{tpu_custom_call.1} parent=71 // pred_check
          %p872 = pneg %p293
        $region90: #{tpu_custom_call.1} parent=71 // pred_check_branch
          %874 = sbr.rel (%p872) target = $region92
        $region91: #{tpu_custom_call.1} parent=71 // pred_region
          %s875 = sand.u32 %s32, 1
          %s876 = scalar_lea.sflag [#allocation8], %s875
          %s877 = sand.u32 %s278, 1
          %s878 = smul.addr %s877, 8
          %s879 = scalar_lea.vmem [#allocation9], %s878
          %881 = dma.done %s876, 128
        $region92: #{tpu_custom_call.1} parent=71 // pred_fallthru
          _
        // Predicated region
        $region93: #{tpu_custom_call.1} parent=71 // pred_check
          %p882 = pneg %p319
        $region94: #{tpu_custom_call.1} parent=71 // pred_check_branch
          %884 = sbr.rel (%p882) target = $region96
        $region95: #{tpu_custom_call.1} parent=71 // pred_region
          %p885 = scmp.lt.s32.totalorder %s37, 1
          %s886 = scalar_select %p885, %s37, 1
          %s887 = scalar_lea.vmem %s10, %s886
        $region96: #{tpu_custom_call.1} parent=71 // pred_fallthru
          _
      $region72: #{tpu_custom_call.1} parent=5 // pred_fallthru
        _
    $region6: #{tpu_custom_call.1} parent=1 // loop_footer
      %s30 = sadd.s32 1, %s26
    $region7: #{tpu_custom_call.1} parent=1 // loop_footer_branch
      %25 = sbr.rel target = $region3
    $region8: #{tpu_custom_call.1} parent=1 // loop_exit
      _
    %888 = vsyncpa [#allocation3], 1
    %s889 = scalar_lea.sflag [#allocation3], 1
    %890 = vsyncpa %s889, 1
    %891 = vsyncpa [#allocation5], 1
    %s892 = scalar_lea.sflag [#allocation5], 1
    %893 = vsyncpa %s892, 1
    %894 = vsyncpa [#allocation8], 1
    %s895 = scalar_lea.sflag [#allocation8], 1
    %896 = vsyncpa %s895, 1

</llo_original>
